<compile_context>
chip_gen: v5e
topology: v5e:2x2
jax: 0.10.0
libtpu: 0.0.40
codegen_flags: <defaults>
</compile_context>

<pallas_src>
import math
from functools import partial

import jax
import jax.numpy as jnp
from jax import lax
from jax.experimental import pallas as pl
from jax.experimental.pallas import tpu as pltpu


def _choose_l_tile(L):
    """Full L for small sequences, else the largest power-of-two divisor <= 512."""
    if L <= 512:
        return L
    for t in (512, 256, 128, 64, 32, 16, 8):
        if L % t == 0:
            return t
    return L  # odd L: single tile covering all of L (still legal: full-extent block)


def _choose_b_tile(B, L, tile_l, c_in, d_pad, x_itemsize, out_itemsize):
    """Largest divisor of B (capped at 8) that keeps the per-step VMEM footprint modest."""
    budget = 10 * 1024 * 1024
    per_b = (tile_l * d_pad * (2 * out_itemsize + 4)   # out double-buffer + f32 matmul temp
             + L * c_in * x_itemsize * 2               # x block (double-buffered)
             + L * 3 * c_in * 4 * 2)                   # shifted copies / fused-tap temp
    tb = max(1, min(B, 8, budget // max(per_b, 1)))
    while B % tb:
        tb -= 1
    return tb


def _token_embedding_kernel(x_ref, w_ref, b_ref, o_ref, *, num_l):
    # x_ref: (tb, L, c_in)        full circular sequence for tb batch rows
    # w_ref: (3*c_in, d_pad)      fused taps, rows ordered [tap0 | tap1 | tap2]
    # b_ref: (1, d_pad)
    # o_ref: (tb, tile_l, d_pad)
    tb, tile_l, _ = o_ref.shape
    L = x_ref.shape[1]

    w = w_ref[...]          # hoisted out of the batch unroll
    brow = b_ref[...]

    if num_l > 1:
        start = pl.multiple_of(pl.program_id(1) * tile_l, tile_l)

    for bb in range(tb):    # static unroll; each iter is an independent 2-D matmul
        x = x_ref[bb]                                                   # (L, c_in)
        # Circular taps: tap k at position t reads x[(t + k - 1) mod L].
        x_m1 = jnp.concatenate([x[L - 1:, :], x[: L - 1, :]], axis=0)   # x[t-1 mod L]
        x_p1 = jnp.concatenate([x[1:, :], x[:1, :]], axis=0)            # x[t+1 mod L]
        x_cat = jnp.concatenate([x_m1, x, x_p1], axis=-1)               # (L, 3*c_in)

        rows = (lax.dynamic_slice_in_dim(x_cat, start, tile_l, axis=0)
                if num_l > 1 else x_cat)

        # Single fused MXU matmul + bias, written directly to this output row.
        out = jnp.dot(rows, w, preferred_element_type=jnp.float32) + brow
        o_ref[bb] = out.astype(o_ref.dtype)


def token_embedding(x, weight, bias):
    """x: (B, L, c_in); weight: (d_model, c_in, 3); bias: (d_model,) -> (B, L, d_model)."""
    B, L, c_in = x.shape
    d_model = weight.shape[0]
    d_pad = ((d_model + 127) // 128) * 128  # lane-dense output stores

    # Fused per-tap weight, channels-last: w_cat[k*c_in + c, o] = weight[o, c, k]
    w_cat = jnp.transpose(weight, (2, 1, 0)).reshape(3 * c_in, d_model).astype(jnp.float32)
    b_row = bias.astype(jnp.float32).reshape(1, d_model)
    if d_pad != d_model:
        w_cat = jnp.pad(w_cat, ((0, 0), (0, d_pad - d_model)))
        b_row = jnp.pad(b_row, ((0, 0), (0, d_pad - d_model)))

    x_itemsize = jnp.dtype(x.dtype).itemsize
    tile_l = _choose_l_tile(L)
    num_l = pl.cdiv(L, tile_l)
    tb = _choose_b_tile(B, L, tile_l, c_in, d_pad, x_itemsize, x_itemsize)

    cost = pl.CostEstimate(
        flops=2 * B * L * 3 * c_in * d_pad,
        transcendentals=0,
        bytes_accessed=(B * L * c_in * x_itemsize        # x read once
                        + B * L * d_pad * x_itemsize     # output written once
                        + w_cat.size * 4 + b_row.size * 4),
    )

    out = pl.pallas_call(
        partial(_token_embedding_kernel, num_l=num_l),
        out_shape=jax.ShapeDtypeStruct((B, L, d_pad), x.dtype),
        grid_spec=pltpu.PrefetchScalarGridSpec(
            num_scalar_prefetch=0,
            grid=(B // tb, num_l),
            in_specs=[
                # Full-L slab for tb batch rows (block index constant over j, so
                # it is not re-DMAed across consecutive L-tile steps).
                pl.BlockSpec((tb, L, c_in), lambda b, j: (b, 0, 0)),
                pl.BlockSpec((3 * c_in, d_pad), lambda b, j: (0, 0)),
                pl.BlockSpec((1, d_pad), lambda b, j: (0, 0)),
            ],
            out_specs=pl.BlockSpec((tb, tile_l, d_pad), lambda b, j: (b, j, 0)),
        ),
        compiler_params=pltpu.CompilerParams(
            dimension_semantics=("parallel", "parallel"),
        ),
        cost_estimate=cost,
    )(x, w_cat, b_row)

    if d_pad != d_model:
        out = out[..., :d_model]
    return out


def _reference(x, weight, bias):
    """Plain-JAX reference of the circular conv1d (for correctness check)."""
    out = jnp.zeros((x.shape[0], x.shape[1], weight.shape[0]), dtype=jnp.float32)
    for k in range(3):
        xk = jnp.roll(x, shift=1 - k, axis=1)  # x[(t + k - 1) mod L]
        out = out + jnp.einsum("blc,oc->blo", xk, weight[:, :, k])
    return out + bias[None, None, :]


if __name__ == "__main__":
    # (batch, seq_len, c_in) -> (batch, seq_len, d_model)
    B, L, c_in, d_model = 2, 16, 4, 32
    key = jax.random.PRNGKey(0)
    kx, kw, kb = jax.random.split(key, 3)

    x = jax.random.normal(kx, (B, L, c_in), dtype=jnp.float32)

    # kaiming_normal_(fan_in, leaky_relu) init for Conv1d weight (d_model, c_in, 3)
    fan_in = c_in * 3
    gain = math.sqrt(2.0 / (1.0 + 0.01 ** 2))
    std = gain / math.sqrt(fan_in)
    weight = std * jax.random.normal(kw, (d_model, c_in, 3), dtype=jnp.float32)
    # Conv1d default bias init: U(-1/sqrt(fan_in), 1/sqrt(fan_in))
    bound = 1.0 / math.sqrt(fan_in)
    bias = jax.random.uniform(kb, (d_model,), minval=-bound, maxval=bound, dtype=jnp.float32)

    out = jax.block_until_ready(token_embedding(x, weight, bias))
    ref = _reference(x, weight, bias)

    assert out.shape == (B, L, d_model)
    assert jnp.allclose(out, ref, atol=1e-4, rtol=1e-4), "mismatch vs reference"

    print("KERNEL_OK")
</pallas_src>

<mosaic_0001>
module attributes {stable_mosaic.version = 11 : i64} {
  func.func @_token_embedding_kernel(%arg0: i32, %arg1: i32, %arg2: memref<2x16x4xf32, #tpu.memory_space<vmem>>, %arg3: memref<12x128xf32, #tpu.memory_space<vmem>>, %arg4: memref<1x128xf32, #tpu.memory_space<vmem>>, %arg5: memref<2x16x128xf32, #tpu.memory_space<vmem>>) attributes {dimension_semantics = [#tpu.dimension_semantics<parallel>, #tpu.dimension_semantics<parallel>], iteration_bounds = array<i64: 1, 1>, scalar_prefetch = 0 : i64, scratch_operands = 0 : i64, tpu.core_type = #tpu.core_type<tc>, window_params = [{transform_indices = @transform_0, window_bounds = array<i64: 2, 16, 4>}, {pipeline_mode = #tpu.pipeline_mode<synchronous>, transform_indices = @transform_1, window_bounds = array<i64: 12, 128>}, {pipeline_mode = #tpu.pipeline_mode<synchronous>, transform_indices = @transform_2, window_bounds = array<i64: 1, 128>}, {transform_indices = @transform_3, window_bounds = array<i64: 2, 16, 128>}]} {
    %c0 = arith.constant 0 : index
    %c0_0 = arith.constant 0 : index
    %0 = vector.load %arg3[%c0, %c0_0] : memref<12x128xf32, #tpu.memory_space<vmem>>, vector<12x128xf32>
    %c0_1 = arith.constant 0 : index
    %c0_2 = arith.constant 0 : index
    %1 = vector.load %arg4[%c0_1, %c0_2] : memref<1x128xf32, #tpu.memory_space<vmem>>, vector<1x128xf32>
    %c0_3 = arith.constant 0 : index
    %c0_4 = arith.constant 0 : index
    %c0_5 = arith.constant 0 : index
    %2 = vector.load %arg2[%c0_3, %c0_4, %c0_5] : memref<2x16x4xf32, #tpu.memory_space<vmem>>, vector<1x16x4xf32>
    %3 = vector.shape_cast %2 : vector<1x16x4xf32> to vector<16x4xf32>
    %4 = vector.extract_strided_slice %3 {offsets = [15, 0], sizes = [1, 4], strides = [1, 1]} : vector<16x4xf32> to vector<1x4xf32>
    %5 = vector.extract_strided_slice %3 {offsets = [0, 0], sizes = [15, 4], strides = [1, 1]} : vector<16x4xf32> to vector<15x4xf32>
    %6 = tpu.concatenate %4, %5 in 0 : vector<1x4xf32>, vector<15x4xf32> -> vector<16x4xf32>
    %7 = vector.extract_strided_slice %3 {offsets = [1, 0], sizes = [15, 4], strides = [1, 1]} : vector<16x4xf32> to vector<15x4xf32>
    %8 = vector.extract_strided_slice %3 {offsets = [0, 0], sizes = [1, 4], strides = [1, 1]} : vector<16x4xf32> to vector<1x4xf32>
    %9 = tpu.concatenate %7, %8 in 0 : vector<15x4xf32>, vector<1x4xf32> -> vector<16x4xf32>
    %10 = tpu.concatenate %6, %3, %9 in 1 : vector<16x4xf32>, vector<16x4xf32>, vector<16x4xf32> -> vector<16x12xf32>
    %cst = arith.constant dense<0.000000e+00> : vector<16x128xf32>
    %11 = tpu.matmul %10, %0, %cst {dimension_numbers = #tpu.dot_dimension_numbers<[1], [0], [0], [1], [0, 0, 1, 1], [], []>} : vector<16x12xf32>, vector<12x128xf32>, vector<16x128xf32> -> vector<16x128xf32>
    %12 = vector.broadcast %1 : vector<1x128xf32> to vector<16x128xf32>
    %13 = arith.addf %11, %12 : vector<16x128xf32>
    %c0_6 = arith.constant 0 : index
    %c0_7 = arith.constant 0 : index
    %c0_8 = arith.constant 0 : index
    %14 = vector.load %arg5[%c0_6, %c0_7, %c0_8] : memref<2x16x128xf32, #tpu.memory_space<vmem>>, vector<1x16x128xf32>
    %15 = vector.shape_cast %14 : vector<1x16x128xf32> to vector<16x128xf32>
    %16 = vector.shape_cast %13 : vector<16x128xf32> to vector<1x16x128xf32>
    tpu.vector_store %arg5[%c0_6, %c0_7, %c0_8], %16 {strides = array<i32>} : memref<2x16x128xf32, #tpu.memory_space<vmem>>, vector<1x16x128xf32>,
    %c1 = arith.constant 1 : index
    %c0_9 = arith.constant 0 : index
    %c0_10 = arith.constant 0 : index
    %17 = vector.load %arg2[%c1, %c0_9, %c0_10] : memref<2x16x4xf32, #tpu.memory_space<vmem>>, vector<1x16x4xf32>
    %18 = vector.shape_cast %17 : vector<1x16x4xf32> to vector<16x4xf32>
    %19 = vector.extract_strided_slice %18 {offsets = [15, 0], sizes = [1, 4], strides = [1, 1]} : vector<16x4xf32> to vector<1x4xf32>
    %20 = vector.extract_strided_slice %18 {offsets = [0, 0], sizes = [15, 4], strides = [1, 1]} : vector<16x4xf32> to vector<15x4xf32>
    %21 = tpu.concatenate %19, %20 in 0 : vector<1x4xf32>, vector<15x4xf32> -> vector<16x4xf32>
    %22 = vector.extract_strided_slice %18 {offsets = [1, 0], sizes = [15, 4], strides = [1, 1]} : vector<16x4xf32> to vector<15x4xf32>
    %23 = vector.extract_strided_slice %18 {offsets = [0, 0], sizes = [1, 4], strides = [1, 1]} : vector<16x4xf32> to vector<1x4xf32>
    %24 = tpu.concatenate %22, %23 in 0 : vector<15x4xf32>, vector<1x4xf32> -> vector<16x4xf32>
    %25 = tpu.concatenate %21, %18, %24 in 1 : vector<16x4xf32>, vector<16x4xf32>, vector<16x4xf32> -> vector<16x12xf32>
    %cst_11 = arith.constant dense<0.000000e+00> : vector<16x128xf32>
    %26 = tpu.matmul %25, %0, %cst_11 {dimension_numbers = #tpu.dot_dimension_numbers<[1], [0], [0], [1], [0, 0, 1, 1], [], []>} : vector<16x12xf32>, vector<12x128xf32>, vector<16x128xf32> -> vector<16x128xf32>
    %27 = vector.broadcast %1 : vector<1x128xf32> to vector<16x128xf32>
    %28 = arith.addf %26, %27 : vector<16x128xf32>
    %c1_12 = arith.constant 1 : index
    %c0_13 = arith.constant 0 : index
    %c0_14 = arith.constant 0 : index
    %29 = vector.load %arg5[%c1_12, %c0_13, %c0_14] : memref<2x16x128xf32, #tpu.memory_space<vmem>>, vector<1x16x128xf32>
    %30 = vector.shape_cast %29 : vector<1x16x128xf32> to vector<16x128xf32>
    %31 = vector.shape_cast %28 : vector<16x128xf32> to vector<1x16x128xf32>
    tpu.vector_store %arg5[%c1_12, %c0_13, %c0_14], %31 {strides = array<i32>} : memref<2x16x128xf32, #tpu.memory_space<vmem>>, vector<1x16x128xf32>,
    return
  }
  func.func @transform_0(%arg0: i32, %arg1: i32) -> (i32, i32, i32) {
    %c0_i32 = arith.constant 0 : i32
    %c0_i32_0 = arith.constant 0 : i32
    %c0_i32_1 = arith.constant 0 : i32
    return %arg0, %c0_i32, %c0_i32_0 : i32, i32, i32
  }
  func.func @transform_1(%arg0: i32, %arg1: i32) -> (i32, i32) {
    %c0_i32 = arith.constant 0 : i32
    %c0_i32_0 = arith.constant 0 : i32
    %c0_i32_1 = arith.constant 0 : i32
    return %c0_i32, %c0_i32_0 : i32, i32
  }
  func.func @transform_2(%arg0: i32, %arg1: i32) -> (i32, i32) {
    %c0_i32 = arith.constant 0 : i32
    %c0_i32_0 = arith.constant 0 : i32
    %c0_i32_1 = arith.constant 0 : i32
    return %c0_i32, %c0_i32_0 : i32, i32
  }
  func.func @transform_3(%arg0: i32, %arg1: i32) -> (i32, i32, i32) {
    %c0_i32 = arith.constant 0 : i32
    %c0_i32_0 = arith.constant 0 : i32
    return %arg0, %arg1, %c0_i32 : i32, i32, i32
  }
}

</mosaic_0001>

<llo_original>
// kernel: tpu_custom_call.1
$region0: #{tpu_custom_call.1}
  #allocation0 [shape = 'u32[]', space=smem, size = 0x4, offset = 0x4, fixed_abs, tag = 'smem constant byte address 0x4 - core index']
  #allocation1 [shape = 'u32[72,128]{1,0:T(1,128)}', space=vmem, size = 0x9000, scoped, tag = 'internal scratch']
  %s0 = inlined_call_operand.vmem [shape: f32[2,16,4], index: 0, kind: input, shape index: {}]
  %s1 = inlined_call_operand.vmem [shape: f32[12,128], index: 1, kind: input, shape index: {}]
  %s2 = inlined_call_operand.vmem [shape: f32[1,128], index: 2, kind: input, shape index: {}]
  %s3 = inlined_call_operand.hbm [shape: f32[2,16,128], index: 3, kind: output, shape index: {}]
  %s4 = sld [smem:[#allocation0]]
  $region22: #{tpu_custom_call.1} parent=0
    _
  %s6 = ssub.s32 1, %s4
  %s7 = scalar_select 0, %s6, %s4
  $region1: #{tpu_custom_call.1} parent=0
    #allocation2 [shape = 'u8[16384]{0}', space=vmem, size = 0x4000, scoped, tag = 'output window, operand 0, single buffered']
    #allocation3 [shape = 's32[1]{0}', space=sflag, size = 0x4, scoped, tag = 'scoped memory for tpu_custom_call.1']
    %8 = vsyncpa [#allocation3], 0
    // Predicated region
    $region2: #{tpu_custom_call.1} parent=1 // pred_check
      _
    $region3: #{tpu_custom_call.1} parent=1 // pred_check_branch
      %10 = sbr.rel (0) target = $region5
    $region4: #{tpu_custom_call.1} parent=1 // pred_region
      _
    $region5: #{tpu_custom_call.1} parent=1 // pred_fallthru
      _
    // Predicated region
    $region6: #{tpu_custom_call.1} parent=1 // pred_check
      _
    $region7: #{tpu_custom_call.1} parent=1 // pred_check_branch
      %12 = sbr.rel (0) target = $region9
    $region8: #{tpu_custom_call.1} parent=1 // pred_region
      _
    $region9: #{tpu_custom_call.1} parent=1 // pred_fallthru
      _
    // Predicated region
    $region10: #{tpu_custom_call.1} parent=1 // pred_check
      _
    $region11: #{tpu_custom_call.1} parent=1 // pred_check_branch
      %14 = sbr.rel (0) target = $region13
    $region12: #{tpu_custom_call.1} parent=1 // pred_region
      _
    $region13: #{tpu_custom_call.1} parent=1 // pred_fallthru
      _
    %v15 = vld [vmem:[%s1] sm:$0xff]
    %v16 = vld [vmem:[%s1 + $0x8] sm:$0xf]
    %v17 = vld [vmem:[%s2] sm:$0x1]
    %v18 = vld [vmem:[%s0] sm:$0xff]
    %v19 = vld [vmem:[%s0 + $0x8] sm:$0xff]
    %v21 = vrot.slane %v19, 7
    %vm24 = vcmask 1040384
    %v25 = vrot.slane %v18, 7
    %v26 = vsel %vm24, %v25, %v21
    %v29 = vsel %vm24, %v21, %v25
    %vm30 = vcmask 1046528
    %v31 = vrot.slane %v18, 1
    %v32 = vrot.slane %v19, 1
    %v33 = vsel %vm30, %v31, %v32
    %v36 = vsel %vm30, %v32, %v31
    %37 = vrot.lane.b32.xlu0 %v18, 4
    %v38 = vpop.permute.xlu0 %37
    %39 = vrot.lane.b32.xlu0 %v19, 4
    %v40 = vpop.permute.xlu0 %39
    %44 = vrot.lane.b32.xlu0 %v33, 8
    %v45 = vpop.permute.xlu0 %44
    %46 = vrot.lane.b32.xlu0 %v36, 8
    %v47 = vpop.permute.xlu0 %46
    %vm50 = vcmask 31744
    %v51 = vsel %vm50, %v29, %v38
    %v52 = vsel %vm50, %v26, %v40
    %vm53 = vcmask 64512
    %v54 = vsel %vm53, %v51, %v45
    %v55 = vsel %vm53, %v52, %v47
    %v57 = vperm.slane %v17, 0
    %vm59 = vcmask 97280
    %v61 = vsel %vm59, %v54, 0
    %v64 = vsel %vm59, %v55, 0
    %vm66 = vcmask 1043456
    %v68 = vsel %vm66, %v16, 0
    %70 = vmatpush.msra.mxu0 0.0
    %71 = vmatpush.msra.mxu0 0.0
    %72 = vmatpush.msra.mxu0 0.0
    %73 = vmatpush.msra.mxu0 0.0
    %74 = vmatpush.msra.mxu0 0.0
    %75 = vmatpush.msra.mxu0 0.0
    %76 = vmatpush.msra.mxu0 0.0
    %77 = vmatpush.msra.mxu0 0.0
    %78 = vmatpush.msra.mxu0 0.0
    %79 = vmatpush.msra.mxu0 0.0
    %80 = vmatpush.msra.mxu0 0.0
    %81 = vmatpush.msra.mxu0 0.0
    %82 = vmatpush.msra.mxu0 0.0
    %83 = vmatpush.msra.mxu0 0.0
    %84 = vmatpush.msra.mxu0 %v68
    %85 = vmatpush.msra.mxu0 %v15
    %86 = vmatmul.f32.gmra.mxu0 %v61
    %v87 = vpop.f32.mrf.mxu0
    %v88 = vadd.f32 %v57, %v87
    %89 = vmatmul.f32.gmra.mxu0 %v64
    %v90 = vpop.f32.mrf.mxu0
    %v91 = vadd.f32 %v57, %v90
    %92 = vdwg.mxu0
    %93 = vst [vmem:[#allocation2] sm:$0xff] %v88
    %94 = vst [vmem:[#allocation2 + $0x8] sm:$0xff] %v91
    %s95 = scalar_lea.vmem %s0, 16
    %v96 = vld [vmem:[%s95] sm:$0xff]
    %v97 = vld [vmem:[%s95 + $0x8] sm:$0xff]
    %v99 = vrot.slane %v97, 7
    %v102 = vrot.slane %v96, 7
    %v103 = vsel %vm24, %v102, %v99
    %v106 = vsel %vm24, %v99, %v102
    %v107 = vrot.slane %v96, 1
    %v108 = vrot.slane %v97, 1
    %v109 = vsel %vm30, %v107, %v108
    %v112 = vsel %vm30, %v108, %v107
    %113 = vrot.lane.b32.xlu0 %v96, 4
    %v114 = vpop.permute.xlu0 %113
    %115 = vrot.lane.b32.xlu0 %v97, 4
    %v116 = vpop.permute.xlu0 %115
    %120 = vrot.lane.b32.xlu0 %v109, 8
    %v121 = vpop.permute.xlu0 %120
    %122 = vrot.lane.b32.xlu0 %v112, 8
    %v123 = vpop.permute.xlu0 %122
    %v126 = vsel %vm50, %v106, %v114
    %v127 = vsel %vm50, %v103, %v116
    %v128 = vsel %vm53, %v126, %v121
    %v129 = vsel %vm53, %v127, %v123
    %v131 = vsel %vm59, %v128, 0
    %v134 = vsel %vm59, %v129, 0
    %136 = vmatpush.msra.mxu0 0.0
    %137 = vmatpush.msra.mxu0 0.0
    %138 = vmatpush.msra.mxu0 0.0
    %139 = vmatpush.msra.mxu0 0.0
    %140 = vmatpush.msra.mxu0 0.0
    %141 = vmatpush.msra.mxu0 0.0
    %142 = vmatpush.msra.mxu0 0.0
    %143 = vmatpush.msra.mxu0 0.0
    %144 = vmatpush.msra.mxu0 0.0
    %145 = vmatpush.msra.mxu0 0.0
    %146 = vmatpush.msra.mxu0 0.0
    %147 = vmatpush.msra.mxu0 0.0
    %148 = vmatpush.msra.mxu0 0.0
    %149 = vmatpush.msra.mxu0 0.0
    %150 = vmatpush.msra.mxu0 %v68
    %151 = vmatpush.msra.mxu0 %v15
    %152 = vmatmul.f32.gmra.mxu0 %v131
    %v153 = vpop.f32.mrf.mxu0
    %v154 = vadd.f32 %v57, %v153
    %155 = vmatmul.f32.gmra.mxu0 %v134
    %v156 = vpop.f32.mrf.mxu0
    %v157 = vadd.f32 %v57, %v156
    %158 = vdwg.mxu0
    %s159 = scalar_lea.vmem [#allocation2], 16
    %160 = vst [vmem:[%s159] sm:$0xff] %v154
    %161 = vst [vmem:[%s159 + $0x8] sm:$0xff] %v157
    // Predicated region
    $region14: #{tpu_custom_call.1} parent=1 // pred_check
      _
    $region15: #{tpu_custom_call.1} parent=1 // pred_check_branch
      %163 = sbr.rel (0) target = $region17
    $region16: #{tpu_custom_call.1} parent=1 // pred_region
      %165 = vsyncadd [#allocation3], 0
      %s166 = sshll.u32 [#allocation2], 4
      %s167 = int_to_ptr.vmem [resolvable:$true] %s166
      %s168 = sshll.u32 %s3, 4
      %s169 = int_to_ptr.hbm [resolvable:$true] %s168
      %174 = dma.vmem_to_hbm [thread:$0]  %s167, 512, %s169, [#allocation3], 128, 128, 8
    $region17: #{tpu_custom_call.1} parent=1 // pred_fallthru
      _
    // Predicated region
    $region18: #{tpu_custom_call.1} parent=1 // pred_check
      _
    $region19: #{tpu_custom_call.1} parent=1 // pred_check_branch
      %176 = sbr.rel (0) target = $region21
    $region20: #{tpu_custom_call.1} parent=1 // pred_region
      %178 = dma.done [#allocation3], 512
    $region21: #{tpu_custom_call.1} parent=1 // pred_fallthru
      _
    %179 = vsyncpa [#allocation3], 1

</llo_original>
